<compile_context>
chip_gen: v7x
topology: tpu7x:2x2x1
jax: 0.10.0
libtpu: 0.0.40
codegen_flags: <defaults>
</compile_context>

<pallas_src>
import functools

import jax
import jax.numpy as jnp
from jax import lax
from jax.experimental import pallas as pl
from jax.experimental.pallas import tpu as pltpu


def _ntxent_kernel(zis_hbm, zjs_hbm, out_ref,
                   rn_ref, rnT_ref, diff_ref, stage_ref, acc_ref, dma_sem,
                   *, temperature, batch_size, row_tile, inner_steps,
                   compute_dtype):
    B = batch_size
    N = 2 * B
    TM = row_tile
    inv_t = jnp.float32(1.0 / temperature)

    c = pl.program_id(0)          # megacore split axis ("parallel")
    i = pl.program_id(1)          # row-tile axis within this core ("arbitrary")

    # ---- step 0 (per core): DMA inputs, normalize, build rn / rnT / diff. ----
    @pl.when(i == 0)
    def _init():
        acc_ref[...] = jnp.zeros_like(acc_ref)
        # col - local_row; on-diagonal test per step is then `diff == r0`.
        diff_ref[...] = (lax.broadcasted_iota(jnp.int32, (TM, N), 1)
                         - lax.broadcasted_iota(jnp.int32, (TM, N), 0))

        def load_normalize_store(src_hbm, sem_slot, row_off):
            cp = pltpu.make_async_copy(src_hbm, stage_ref, dma_sem.at[sem_slot])
            cp.start()
            cp.wait()
            x = stage_ref[...].astype(jnp.float32)
            # F.normalize(x, dim=1, eps=1e-12) == x * rsqrt(max(sum(x^2), 1e-24))
            inv_norm = lax.rsqrt(
                jnp.maximum(jnp.sum(x * x, axis=1, keepdims=True), 1e-24))
            xn = x * inv_norm
            rn_ref[pl.ds(row_off, B), :] = xn.astype(compute_dtype)
            rnT_ref[:, pl.ds(row_off, B)] = xn.T.astype(compute_dtype)

        load_normalize_store(zis_hbm, 0, 0)
        load_normalize_store(zjs_hbm, 1, B)

    # ---- per step: (TM, N) similarity slab for global rows [r0, r0 + TM). ----
    r_blk = c * inner_steps + i
    r0 = pl.multiple_of(r_blk * TM, TM)

    rows_f32 = rn_ref[pl.ds(r0, TM), :].astype(jnp.float32)
    lhs_f32 = rows_f32 * inv_t                       # 1/T folded into LHS only
    lhs = lhs_f32.astype(compute_dtype)

    # Plain [TM, Dp] x [Dp, N] matmul against the pre-transposed rnT.
    sim = jnp.dot(lhs, rnT_ref[...], preferred_element_type=jnp.float32)

    # Positives: partner of global row g is rn[(g + B) mod N]; TM | B so the
    # partner rows form one contiguous TM-slice -> (TM, Dp) multiply-reduce.
    p0 = pl.multiple_of((r0 + B) % N, TM)
    partner = rn_ref[pl.ds(p0, TM), :].astype(jnp.float32)
    pos = jnp.sum(lhs_f32 * partner, axis=1, keepdims=True)       # (TM, 1)

    # Masked log-sum-exp over j != g with constant stabilizer 1/T.
    on_diag = diff_ref[...] == r0
    e = jnp.where(on_diag, 0.0, jnp.exp(sim - inv_t))
    denom = jnp.sum(e, axis=1, keepdims=True)                     # (TM, 1)
    lse = inv_t + jnp.log(denom)

    acc_ref[...] += jnp.sum(lse - pos, axis=0, keepdims=True)     # (1, 1)

    @pl.when(i == inner_steps - 1)
    def _finalize():
        val = acc_ref[0, 0] * jnp.float32(1.0 / N)
        out_ref[...] = jnp.full((1, 8, 128), val, dtype=jnp.float32)


def _round_up(x, m):
    return (x + m - 1) // m * m


def _vmem_capacity_bytes():
    try:
        return int(pltpu.get_tpu_info().vmem_capacity_bytes)
    except Exception:
        return 64 * 2**20     # conservative: v7x per-core VMEM


def _pick_row_tile(B, fixed_bytes, step_bytes_fn, budget_bytes):
    divisors = [t for t in range(1, B + 1) if B % t == 0]
    fitting = [t for t in divisors
               if t <= 256 and fixed_bytes + step_bytes_fn(t) <= budget_bytes]
    if not fitting:
        fitting = [min(divisors)]
    aligned = [t for t in fitting if t % 8 == 0]
    return max(aligned) if aligned else max(fitting)


def nt_xent_loss(zis, zjs, temperature, *, row_tile=None, use_bf16_matmul=True):
    """NT-Xent loss matching NT_XentLoss(batch, T, device, world_size=1).forward."""
    assert zis.shape == zjs.shape and zis.ndim == 2
    assert zis.dtype == zjs.dtype
    B, D = zis.shape
    N = 2 * B

    compute_dtype = jnp.bfloat16 if use_bf16_matmul else jnp.float32
    cbytes = 2 if use_bf16_matmul else 4
    in_bytes = jnp.dtype(zis.dtype).itemsize

    # Lane-dense feature dim (zero pad changes neither norms nor dot products).
    Dp = _round_up(max(D, 128), 128)
    if Dp != D:
        zis = jnp.pad(zis, ((0, 0), (0, Dp - D)))
        zjs = jnp.pad(zjs, ((0, 0), (0, Dp - D)))

    vmem_cap = _vmem_capacity_bytes()
    budget = int(0.70 * vmem_cap)

    npad = _round_up(N, 128)
    fixed = (2 * N * Dp * cbytes            # rn + rnT (resident)
             + B * Dp * in_bytes            # DMA stage
             + (2 << 20))                   # out tile, acc, misc headroom

    def step_bytes(tm):
        # diff scratch (int32) + ~5 live (TM, N) f32 slabs (sim/exp/where/temps)
        return 6 * tm * npad * 4

    TM = row_tile if row_tile is not None else _pick_row_tile(B, fixed, step_bytes, budget)
    assert B % TM == 0 and N % TM == 0

    n_tiles = N // TM
    split = 2 if (n_tiles >= 2 and n_tiles % 2 == 0) else 1   # v7x: one half per TC
    n_per = n_tiles // split

    est = fixed + step_bytes(TM)
    vmem_limit = int(min(max(2 * est, 32 * 2**20), int(0.8 * vmem_cap)))

    kernel = functools.partial(
        _ntxent_kernel,
        temperature=float(temperature),
        batch_size=B,
        row_tile=TM,
        inner_steps=n_per,
        compute_dtype=compute_dtype,
    )

    out = pl.pallas_call(
        kernel,
        out_shape=jax.ShapeDtypeStruct((split, 8, 128), jnp.float32),
        grid=(split, n_per),
        in_specs=[
            pl.BlockSpec(memory_space=pl.ANY),   # zis: raw HBM ref, manual DMA
            pl.BlockSpec(memory_space=pl.ANY),   # zjs: raw HBM ref, manual DMA
        ],
        out_specs=pl.BlockSpec((1, 8, 128), lambda c, i: (c, 0, 0)),
        scratch_shapes=[
            pltpu.VMEM((N, Dp), compute_dtype),   # rn   (rows)
            pltpu.VMEM((Dp, N), compute_dtype),   # rnT  (pre-transposed)
            pltpu.VMEM((TM, N), jnp.int32),       # diff = col - local_row
            pltpu.VMEM((B, Dp), zis.dtype),       # DMA stage (native width)
            pltpu.VMEM((1, 1), jnp.float32),      # scalar loss accumulator
            pltpu.SemaphoreType.DMA((2,)),
        ],
        compiler_params=pltpu.CompilerParams(
            # Leading axis splits row tiles across TensorCores (v7x); the inner
            # axis carries the rn init and the accumulator -> sequential.
            dimension_semantics=("parallel", "arbitrary"),
            vmem_limit_bytes=vmem_limit,
        ),
    )(zis, zjs)

    return jnp.sum(out[:, 0, 0])


def _reference_loss(zis, zjs, temperature):
    # Pure-JAX reference mirroring the PyTorch module semantics (world_size=1).
    B, _ = zis.shape
    N = 2 * B
    zis = zis / jnp.maximum(jnp.linalg.norm(zis, axis=1, keepdims=True), 1e-12)
    zjs = zjs / jnp.maximum(jnp.linalg.norm(zjs, axis=1, keepdims=True), 1e-12)
    r = jnp.concatenate([zis, zjs], axis=0)
    sim = (r @ r.T) / temperature
    pos = jnp.concatenate([jnp.diag(sim, B), jnp.diag(sim, -B)], axis=0)
    mask = ~jnp.eye(N, dtype=bool)
    for i in range(B):
        mask = mask.at[i, B + i].set(False)
        mask = mask.at[B + i, i].set(False)
    neg = sim[mask].reshape(N, -1)
    logits = jnp.concatenate([pos[:, None], neg], axis=1)
    lse = jax.scipy.special.logsumexp(logits, axis=1)
    return jnp.sum(lse - logits[:, 0]) / N


if __name__ == "__main__":
    key = jax.random.PRNGKey(0)
    k1, k2 = jax.random.split(key)
    batch_size, hidden = 8, 32
    temperature = 0.5

    zis = jax.random.normal(k1, (batch_size, hidden), dtype=jnp.float32)
    zjs = jax.random.normal(k2, (batch_size, hidden), dtype=jnp.float32)

    ref = _reference_loss(zis, zjs, temperature)

    # f32-exact path: must match the PyTorch-semantics reference tightly.
    loss_f32 = jax.block_until_ready(
        nt_xent_loss(zis, zjs, temperature, use_bf16_matmul=False))
    assert jnp.allclose(loss_f32, ref, atol=1e-4, rtol=1e-4), (loss_f32, ref)

    # bf16-MXU path (default, faster): looser tolerance for the operand cast.
    loss_bf16 = jax.block_until_ready(
        nt_xent_loss(zis, zjs, temperature, use_bf16_matmul=True))
    assert jnp.allclose(loss_bf16, ref, atol=2e-2, rtol=2e-2), (loss_bf16, ref)

    print("KERNEL_OK")
</pallas_src>

<mosaic_0001>
module attributes {stable_mosaic.version = 11 : i64} {
  func.func @_ntxent_kernel(%arg0: i32, %arg1: i32, %arg2: memref<8x128xf32, #tpu.memory_space<any>>, %arg3: memref<8x128xf32, #tpu.memory_space<any>>, %arg4: memref<1x8x128xf32, #tpu.memory_space<vmem>>, %arg5: memref<16x128xf32, #tpu.memory_space<vmem>>, %arg6: memref<128x16xf32, #tpu.memory_space<vmem>>, %arg7: memref<8x16xi32, #tpu.memory_space<vmem>>, %arg8: memref<8x128xf32, #tpu.memory_space<vmem>>, %arg9: memref<1x1xf32, #tpu.memory_space<vmem>>, %arg10: memref<2x!tpu.dma_semaphore, #tpu.memory_space<semaphore_mem>>) attributes {dimension_semantics = [#tpu.dimension_semantics<parallel>, #tpu.dimension_semantics<arbitrary>], iteration_bounds = array<i64: 2, 1>, scalar_prefetch = 0 : i64, scratch_operands = 6 : i64, tpu.core_type = #tpu.core_type<tc>, window_params = [{}, {}, {transform_indices = @transform_2, window_bounds = array<i64: 1, 8, 128>}]} {
    %c0_i32 = arith.constant 0 : i32
    %0 = arith.cmpi eq, %arg1, %c0_i32 : i32
    %1 = arith.extui %0 : i1 to i32
    %c0_i32_0 = arith.constant 0 : i32
    %2 = arith.cmpi ne, %1, %c0_i32_0 : i32
    scf.if %2 {
      %cst_25 = arith.constant 0.000000e+00 : f32
      %52 = vector.broadcast %cst_25 : f32 to vector<1x1xf32>
      %c0_26 = arith.constant 0 : index
      %c0_27 = arith.constant 0 : index
      %53 = vector.load %arg9[%c0_26, %c0_27] : memref<1x1xf32, #tpu.memory_space<vmem>>, vector<1x1xf32>
      tpu.vector_store %arg9[%c0_26, %c0_27], %52 {strides = array<i32>} : memref<1x1xf32, #tpu.memory_space<vmem>>, vector<1x1xf32>,
      %54 = tpu.iota {dimensions = array<i32: 1>} : vector<8x16xi32>
      %55 = tpu.iota {dimensions = array<i32: 0>} : vector<8x16xi32>
      %56 = arith.subi %54, %55 : vector<8x16xi32>
      %c0_28 = arith.constant 0 : index
      %c0_29 = arith.constant 0 : index
      %57 = vector.load %arg7[%c0_28, %c0_29] : memref<8x16xi32, #tpu.memory_space<vmem>>, vector<8x16xi32>
      tpu.vector_store %arg7[%c0_28, %c0_29], %56 {strides = array<i32>} : memref<8x16xi32, #tpu.memory_space<vmem>>, vector<8x16xi32>,
      %c0_i32_30 = arith.constant 0 : i32
      %58 = tpu.memref_slice %arg10[%c0_i32_30] : memref<2x!tpu.dma_semaphore, #tpu.memory_space<semaphore_mem>> -> memref<1x!tpu.dma_semaphore, #tpu.memory_space<semaphore_mem>>
      %59 = tpu.memref_squeeze %58 : memref<1x!tpu.dma_semaphore, #tpu.memory_space<semaphore_mem>> -> memref<!tpu.dma_semaphore, #tpu.memory_space<semaphore_mem>>
      tpu.enqueue_dma source(%arg2 : memref<8x128xf32, #tpu.memory_space<any>>) target(%arg8 : memref<8x128xf32, #tpu.memory_space<vmem>>) target_semaphore(%59 : memref<!tpu.dma_semaphore, #tpu.memory_space<semaphore_mem>>)
      %c0_i32_31 = arith.constant 0 : i32
      %60 = tpu.memref_slice %arg10[%c0_i32_31] : memref<2x!tpu.dma_semaphore, #tpu.memory_space<semaphore_mem>> -> memref<1x!tpu.dma_semaphore, #tpu.memory_space<semaphore_mem>>
      %61 = tpu.memref_squeeze %60 : memref<1x!tpu.dma_semaphore, #tpu.memory_space<semaphore_mem>> -> memref<!tpu.dma_semaphore, #tpu.memory_space<semaphore_mem>>
      tpu.wait_dma2 semaphore(%61 : memref<!tpu.dma_semaphore, #tpu.memory_space<semaphore_mem>>) src(%arg2 : memref<8x128xf32, #tpu.memory_space<any>>) dst(%arg8 : memref<8x128xf32, #tpu.memory_space<vmem>>)
      %c0_32 = arith.constant 0 : index
      %c0_33 = arith.constant 0 : index
      %62 = vector.load %arg8[%c0_32, %c0_33] : memref<8x128xf32, #tpu.memory_space<vmem>>, vector<8x128xf32>
      %63 = arith.mulf %62, %62 : vector<8x128xf32>
      %cst_34 = arith.constant dense<0.000000e+00> : vector<8xf32>
      %64 = vector.multi_reduction <add>, %63, %cst_34 [1] : vector<8x128xf32> to vector<8xf32>
      %65 = vector.shape_cast %64 : vector<8xf32> to vector<8x1xf32>
      %cst_35 = arith.constant 1.000000e-24 : f32
      %66 = vector.broadcast %cst_35 : f32 to vector<8x1xf32>
      %67 = arith.maximumf %65, %66 : vector<8x1xf32>
      %68 = math.rsqrt %67 : vector<8x1xf32>
      %69 = vector.broadcast %68 : vector<8x1xf32> to vector<8x128xf32>
      %70 = arith.mulf %62, %69 : vector<8x128xf32>
      %c0_36 = arith.constant 0 : index
      %c0_37 = arith.constant 0 : index
      %71 = vector.load %arg5[%c0_36, %c0_37] : memref<16x128xf32, #tpu.memory_space<vmem>>, vector<8x128xf32>
      tpu.vector_store %arg5[%c0_36, %c0_37], %70 {strides = array<i32>} : memref<16x128xf32, #tpu.memory_space<vmem>>, vector<8x128xf32>,
      %72 = tpu.transpose %70, [1, 0] : vector<8x128xf32> -> vector<128x8xf32>
      %c0_38 = arith.constant 0 : index
      %c0_39 = arith.constant 0 : index
      %73 = vector.load %arg6[%c0_38, %c0_39] : memref<128x16xf32, #tpu.memory_space<vmem>>, vector<128x8xf32>
      tpu.vector_store %arg6[%c0_38, %c0_39], %72 {strides = array<i32>} : memref<128x16xf32, #tpu.memory_space<vmem>>, vector<128x8xf32>,
      %c1_i32_40 = arith.constant 1 : i32
      %74 = tpu.memref_slice %arg10[%c1_i32_40] : memref<2x!tpu.dma_semaphore, #tpu.memory_space<semaphore_mem>> -> memref<1x!tpu.dma_semaphore, #tpu.memory_space<semaphore_mem>>
      %75 = tpu.memref_squeeze %74 : memref<1x!tpu.dma_semaphore, #tpu.memory_space<semaphore_mem>> -> memref<!tpu.dma_semaphore, #tpu.memory_space<semaphore_mem>>
      tpu.enqueue_dma source(%arg3 : memref<8x128xf32, #tpu.memory_space<any>>) target(%arg8 : memref<8x128xf32, #tpu.memory_space<vmem>>) target_semaphore(%75 : memref<!tpu.dma_semaphore, #tpu.memory_space<semaphore_mem>>)
      %c1_i32_41 = arith.constant 1 : i32
      %76 = tpu.memref_slice %arg10[%c1_i32_41] : memref<2x!tpu.dma_semaphore, #tpu.memory_space<semaphore_mem>> -> memref<1x!tpu.dma_semaphore, #tpu.memory_space<semaphore_mem>>
      %77 = tpu.memref_squeeze %76 : memref<1x!tpu.dma_semaphore, #tpu.memory_space<semaphore_mem>> -> memref<!tpu.dma_semaphore, #tpu.memory_space<semaphore_mem>>
      tpu.wait_dma2 semaphore(%77 : memref<!tpu.dma_semaphore, #tpu.memory_space<semaphore_mem>>) src(%arg3 : memref<8x128xf32, #tpu.memory_space<any>>) dst(%arg8 : memref<8x128xf32, #tpu.memory_space<vmem>>)
      %c0_42 = arith.constant 0 : index
      %c0_43 = arith.constant 0 : index
      %78 = vector.load %arg8[%c0_42, %c0_43] : memref<8x128xf32, #tpu.memory_space<vmem>>, vector<8x128xf32>
      %79 = arith.mulf %78, %78 : vector<8x128xf32>
      %cst_44 = arith.constant dense<0.000000e+00> : vector<8xf32>
      %80 = vector.multi_reduction <add>, %79, %cst_44 [1] : vector<8x128xf32> to vector<8xf32>
      %81 = vector.shape_cast %80 : vector<8xf32> to vector<8x1xf32>
      %cst_45 = arith.constant 1.000000e-24 : f32
      %82 = vector.broadcast %cst_45 : f32 to vector<8x1xf32>
      %83 = arith.maximumf %81, %82 : vector<8x1xf32>
      %84 = math.rsqrt %83 : vector<8x1xf32>
      %85 = vector.broadcast %84 : vector<8x1xf32> to vector<8x128xf32>
      %86 = arith.mulf %78, %85 : vector<8x128xf32>
      %c8 = arith.constant 8 : index
      %c0_46 = arith.constant 0 : index
      %87 = vector.load %arg5[%c8, %c0_46] : memref<16x128xf32, #tpu.memory_space<vmem>>, vector<8x128xf32>
      tpu.vector_store %arg5[%c8, %c0_46], %86 {strides = array<i32>} : memref<16x128xf32, #tpu.memory_space<vmem>>, vector<8x128xf32>,
      %88 = tpu.transpose %86, [1, 0] : vector<8x128xf32> -> vector<128x8xf32>
      %c0_47 = arith.constant 0 : index
      %c8_48 = arith.constant 8 : index
      %89 = vector.load %arg6[%c0_47, %c8_48] : memref<128x16xf32, #tpu.memory_space<vmem>>, vector<128x8xf32>
      tpu.vector_store %arg6[%c0_47, %c8_48], %88 {strides = array<i32>} : memref<128x16xf32, #tpu.memory_space<vmem>>, vector<128x8xf32>,
    } else {
    }
    %c1_i32 = arith.constant 1 : i32
    %3 = arith.muli %arg0, %c1_i32 : i32
    %4 = arith.addi %3, %arg1 : i32
    %c8_i32 = arith.constant 8 : i32
    %5 = arith.muli %4, %c8_i32 : i32
    %6 = tpu.assume_multiple %5, 8 : i32
    %7 = arith.index_cast %6 : i32 to index
    %c0 = arith.constant 0 : index
    %8 = vector.load %arg5[%7, %c0] : memref<16x128xf32, #tpu.memory_space<vmem>>, vector<8x128xf32>
    %cst = arith.constant 2.000000e+00 : f32
    %9 = vector.broadcast %cst : f32 to vector<8x128xf32>
    %10 = arith.mulf %8, %9 : vector<8x128xf32>
    %c0_1 = arith.constant 0 : index
    %c0_2 = arith.constant 0 : index
    %11 = vector.load %arg6[%c0_1, %c0_2] : memref<128x16xf32, #tpu.memory_space<vmem>>, vector<128x16xf32>
    %cst_3 = arith.constant dense<0.000000e+00> : vector<8x16xf32>
    %12 = tpu.matmul %10, %11, %cst_3 {dimension_numbers = #tpu.dot_dimension_numbers<[1], [0], [0], [1], [0, 0, 1, 1], [], []>} : vector<8x128xf32>, vector<128x16xf32>, vector<8x16xf32> -> vector<8x16xf32>
    %c8_i32_4 = arith.constant 8 : i32
    %13 = arith.addi %6, %c8_i32_4 : i32
    %c16_i32 = arith.constant 16 : i32
    %c0_i32_5 = arith.constant 0 : i32
    %14 = arith.cmpi eq, %c16_i32, %c0_i32_5 : i32
    %c1_i32_6 = arith.constant 1 : i32
    %15 = arith.select %14, %c1_i32_6, %c16_i32 : i32
    %16 = arith.remsi %13, %15 : i32
    %c0_i32_7 = arith.constant 0 : i32
    %17 = arith.cmpi ne, %16, %c0_i32_7 : i32
    %c0_i32_8 = arith.constant 0 : i32
    %18 = arith.cmpi slt, %16, %c0_i32_8 : i32
    %c0_i32_9 = arith.constant 0 : i32
    %19 = arith.cmpi slt, %15, %c0_i32_9 : i32
    %20 = arith.xori %18, %19 : i1
    %21 = arith.andi %20, %17 : i1
    %22 = arith.addi %16, %15 : i32
    %23 = arith.select %21, %22, %16 : i32
    %24 = tpu.assume_multiple %23, 8 : i32
    %25 = arith.index_cast %24 : i32 to index
    %c0_10 = arith.constant 0 : index
    %26 = vector.load %arg5[%25, %c0_10] : memref<16x128xf32, #tpu.memory_space<vmem>>, vector<8x128xf32>
    %27 = arith.mulf %10, %26 : vector<8x128xf32>
    %cst_11 = arith.constant dense<0.000000e+00> : vector<8xf32>
    %28 = vector.multi_reduction <add>, %27, %cst_11 [1] : vector<8x128xf32> to vector<8xf32>
    %29 = vector.shape_cast %28 : vector<8xf32> to vector<8x1xf32>
    %c0_12 = arith.constant 0 : index
    %c0_13 = arith.constant 0 : index
    %30 = vector.load %arg7[%c0_12, %c0_13] : memref<8x16xi32, #tpu.memory_space<vmem>>, vector<8x16xi32>
    %31 = vector.broadcast %6 : i32 to vector<8x16xi32>
    %32 = arith.cmpi eq, %30, %31 : vector<8x16xi32>
    %cst_14 = arith.constant 2.000000e+00 : f32
    %33 = vector.broadcast %cst_14 : f32 to vector<8x16xf32>
    %34 = arith.subf %12, %33 : vector<8x16xf32>
    %35 = math.exp %34 : vector<8x16xf32>
    %cst_15 = arith.constant 0.000000e+00 : f32
    %36 = vector.broadcast %cst_15 : f32 to vector<8x16xf32>
    %37 = arith.select %32, %36, %35 : vector<8x16xi1>, vector<8x16xf32>
    %cst_16 = arith.constant dense<0.000000e+00> : vector<8xf32>
    %38 = vector.multi_reduction <add>, %37, %cst_16 [1] : vector<8x16xf32> to vector<8xf32>
    %39 = vector.shape_cast %38 : vector<8xf32> to vector<8x1xf32>
    %40 = math.log %39 : vector<8x1xf32>
    %cst_17 = arith.constant 2.000000e+00 : f32
    %41 = vector.broadcast %cst_17 : f32 to vector<8x1xf32>
    %42 = arith.addf %41, %40 : vector<8x1xf32>
    %c0_18 = arith.constant 0 : index
    %c0_19 = arith.constant 0 : index
    %43 = vector.load %arg9[%c0_18, %c0_19] : memref<1x1xf32, #tpu.memory_space<vmem>>, vector<1x1xf32>
    %44 = arith.subf %42, %29 : vector<8x1xf32>
    %cst_20 = arith.constant dense<0.000000e+00> : vector<1xf32>
    %45 = vector.multi_reduction <add>, %44, %cst_20 [0] : vector<8x1xf32> to vector<1xf32>
    %46 = vector.shape_cast %45 : vector<1xf32> to vector<1x1xf32>
    %47 = arith.addf %43, %46 : vector<1x1xf32>
    %c0_21 = arith.constant 0 : index
    %c0_22 = arith.constant 0 : index
    %48 = vector.load %arg9[%c0_21, %c0_22] : memref<1x1xf32, #tpu.memory_space<vmem>>, vector<1x1xf32>
    tpu.vector_store %arg9[%c0_21, %c0_22], %47 {strides = array<i32>} : memref<1x1xf32, #tpu.memory_space<vmem>>, vector<1x1xf32>,
    %c0_i32_23 = arith.constant 0 : i32
    %49 = arith.cmpi eq, %arg1, %c0_i32_23 : i32
    %50 = arith.extui %49 : i1 to i32
    %c0_i32_24 = arith.constant 0 : i32
    %51 = arith.cmpi ne, %50, %c0_i32_24 : i32
    scf.if %51 {
      %c0_25 = arith.constant 0 : index
      %c0_26 = arith.constant 0 : index
      %52 = vector.load %arg9[%c0_25, %c0_26] : memref<1x1xf32, #tpu.memory_space<vmem>>, vector<1x1xf32>
      %53 = vector.extract %52[0, 0] : f32 from vector<1x1xf32>
      %cst_27 = arith.constant 6.250000e-02 : f32
      %54 = arith.mulf %53, %cst_27 : f32
      %55 = vector.broadcast %54 : f32 to vector<1x8x128xf32>
      %c0_28 = arith.constant 0 : index
      %c0_29 = arith.constant 0 : index
      %c0_30 = arith.constant 0 : index
      %56 = vector.load %arg4[%c0_28, %c0_29, %c0_30] : memref<1x8x128xf32, #tpu.memory_space<vmem>>, vector<1x8x128xf32>
      tpu.vector_store %arg4[%c0_28, %c0_29, %c0_30], %55 {strides = array<i32>} : memref<1x8x128xf32, #tpu.memory_space<vmem>>, vector<1x8x128xf32>,
    } else {
    }
    return
  }
  func.func @transform_2(%arg0: i32, %arg1: i32) -> (i32, i32, i32) {
    %c0_i32 = arith.constant 0 : i32
    %c0_i32_0 = arith.constant 0 : i32
    %c0_i32_1 = arith.constant 0 : i32
    return %arg0, %c0_i32, %c0_i32_0 : i32, i32, i32
  }
}

</mosaic_0001>

<llo_original>
// kernel: tpu_custom_call.1
$region0: #{tpu_custom_call.1}
  #allocation0 [shape = 'u32[]', space=smem, size = 0x4, offset = 0x4, fixed_abs, tag = 'smem constant byte address 0x4 - core index']
  #allocation1 [shape = 'u32[144,128]{1,0:T(1,128)}', space=vmem, size = 0x12000, scoped, tag = 'internal scratch']
  #allocation2 [shape = 'f32[16,128]{1,0:T(8,128)}', space=vmem, size = 0x2000, scoped, tag = 'scratch operand']
  #allocation3 [shape = 'f32[128,16]{1,0:T(8,128)}', space=vmem, size = 0x10000, scoped, tag = 'scratch operand']
  #allocation4 [shape = 's32[8,16]{1,0:T(8,128)}', space=vmem, size = 0x1000, scoped, tag = 'scratch operand']
  #allocation5 [shape = 'f32[8,128]{1,0:T(8,128)}', space=vmem, size = 0x1000, scoped, tag = 'scratch operand']
  #allocation6 [shape = 'f32[1,1]{1,0:T(1,128)}', space=vmem, size = 0x200, scoped, tag = 'scratch operand']
  #allocation7 [shape = 's32[2]{0}', space=sflag, size = 0x8, scoped, tag = 'scratch operand']
  #allocation10 [shape = 's32[]', space=sflag, size = 0x4, offset = 0, fixed_abs, tag = 'sflag constant byte address 0x0 - dummy sync flag']
  #allocation11 [shape = 's32[]', space=sflag, size = 0x4, offset = 0, fixed_abs, tag = 'sflag constant byte address 0x0 - dummy sync flag']
  #allocation12 [shape = 'u32[]', space=smem, size = 0x4, offset = 0x44, fixed_abs, tag = 'smem constant byte address 0x44 - assertion arg 0']
  #allocation13 [shape = 'u32[]', space=smem, size = 0x4, offset = 0x48, fixed_abs, tag = 'smem constant byte address 0x48 - assertion arg 1']
  #allocation14 [shape = 's32[]', space=sflag, size = 0x4, offset = 0, fixed_abs, tag = 'sflag constant byte address 0x0 - dummy sync flag']
  #allocation15 [shape = 's32[]', space=sflag, size = 0x4, offset = 0, fixed_abs, tag = 'sflag constant byte address 0x0 - dummy sync flag']
  %s0 = inlined_call_operand.hbm [shape: f32[8,128], index: 0, kind: input, shape index: {}]
  %s1 = inlined_call_operand.hbm [shape: f32[8,128], index: 1, kind: input, shape index: {}]
  %s2 = inlined_call_operand.hbm [shape: f32[2,8,128], index: 2, kind: output, shape index: {}]
  %s3 = sld [smem:[#allocation0]]
  $region41: #{tpu_custom_call.1} parent=0
    _
  %s5 = ssub.s32 1, %s3
  %s6 = scalar_select 0, %s5, %s3
  $region1: #{tpu_custom_call.1} parent=0
    #allocation8 [shape = 'u8[8192]{0}', space=vmem, size = 0x2000, scoped, tag = 'output window, operand 0']
    #allocation9 [shape = 's32[2]{0}', space=sflag, size = 0x8, scoped, tag = 'scoped memory for tpu_custom_call.1']
    %7 = vsyncpa [#allocation9], 0
    %s8 = scalar_lea.sflag [#allocation9], 1
    %9 = vsyncpa %s8, 0
    loop: start=0, step=1, limit=3
    $region2: #{tpu_custom_call.1} parent=1 // loop_pre_header
      _
    $region3: #{tpu_custom_call.1} parent=1 // loop_header
      %s11 = sphi 0, %s15
      %p12 = scmp.ge.s32.totalorder %s11, 3
      %s17 = sphi 0, %s27
      %s18 = sphi 0, %s23
      %s19 = sphi 0, %s17
      %s20 = sphi 0, %s18
      %s30 = sphi 0, %s32
      %s33 = sphi 0, %s30
      %s43 = sphi 0, %s33
    $region4: #{tpu_custom_call.1} parent=1 // loop_header_branch
      %14 = sbr.rel (%p12) target = $region8
    $region5: #{tpu_custom_call.1} parent=1 // loop_body
      %s16 = ssub.s32 %s11, 1
      %s21 = sadd.s32 1, %s18
      %p22 = scmp.ge.s32.totalorder %s21, 1
      %s23 = scalar_select %p22, 0, %s21
      %s24 = sadd.s32 1, %s17
      %s25 = scalar_select %p22, %s24, %s17
      %p26 = scmp.ge.s32.totalorder %s25, 2
      %s27 = scalar_select %p26, 0, %s25
      %s28 = ssub.s32 %s17, %s27
      %p29 = scmp.eq.s32.totalorder %s28, 0
      %s31 = sadd.s32 %s30, 1
      %s32 = scalar_select %p29, %s30, %s31
      %p34 = pneg %p29
      %p35 = scmp.eq.s32.totalorder %s11, 1
      %p36 = por %p34, %p35
      %p37 = scmp.ne.s32.totalorder %s30, %s33
      %p38 = scmp.eq.s32.totalorder %s11, 0
      %p39 = por %p37, %p38
      %p40 = scmp.ne.s32.totalorder %s30, %s33
      %p41 = scmp.eq.s32.totalorder %s16, 1
      %p42 = por %p40, %p41
      %p44 = scmp.ne.s32.totalorder %s33, %s43
      %p45 = scmp.eq.s32.totalorder %s16, 0
      %p46 = por %p44, %p45
      %p47 = scmp.lt.s32.totalorder %s11, 2
      // Predicated region
      $region9: #{tpu_custom_call.1} parent=5 // pred_check
        %p48 = pneg %p47
      $region10: #{tpu_custom_call.1} parent=5 // pred_check_branch
        %50 = sbr.rel (%p48) target = $region12
      $region11: #{tpu_custom_call.1} parent=5 // pred_region
        %p51 = pneg %p39
        %p52 = pneg %p36
        %s53 = sand.u32 %s30, 1
        %s54 = scalar_lea.sflag [#allocation9], %s53
        %s55 = sand.u32 %s30, 1
        %s56 = smul.addr %s55, 8
        %s57 = scalar_lea.vmem [#allocation8], %s56
        %p58 = scmp.eq.s32.totalorder %s18, 0
        // Predicated region
        $region13: #{tpu_custom_call.1} parent=11 // pred_check
          %p59 = pneg %p58
        $region14: #{tpu_custom_call.1} parent=11 // pred_check_branch
          %61 = sbr.rel (%p59) target = $region16
        $region15: #{tpu_custom_call.1} parent=11 // pred_region
          %vm62 = vcmask 0
          %63 = vst.msk [vmem:[#allocation6] sm:$0x1] %vm62, 0.0
          %v64 = vlaneseq
          %v65 = vand.u32 %v64, 127
          %v66 = vlaneseq
          %v67 = vshrl.u32 %v66, 7
          %v68 = vsub.s32 %v65, %v67
          %vm69 = vcmask 130048
          %70 = vst.msk [vmem:[#allocation4] sm:$0xff] %vm69, %v68
          // Predicated region
          $region17: #{tpu_custom_call.1} parent=15 // pred_check
            _
          $region18: #{tpu_custom_call.1} parent=15 // pred_check_branch
            %72 = sbr.rel target = $region20
          $region19: #{tpu_custom_call.1} parent=15 // pred_region
            %73 = sst [smem:[#allocation12]] [#allocation11]
            %74 = sst [smem:[#allocation13]] [#allocation10]
          $region20: #{tpu_custom_call.1} parent=15 // pred_fallthru
            _
          %76 = shalt.err (0)
          %s78 = sshll.u32 [#allocation5], 4
          %s79 = int_to_ptr.vmem [resolvable:$true] %s78
          %81 = dma.hbm_to_vmem [thread:$0]  %s0, 128, %s79, [#allocation7]
          %s82 = smul.u32 8, 1
          %s83 = sshll.u32 %s82, 4
          %84 = dma.done [#allocation7], %s83
          %v85 = vld [vmem:[#allocation5] sm:$0xff]
          %v86 = vmul.f32 %v85, %v85
          %87 = vadd.xlane.f32.xlu0 %v86
          %v88 = vpop.xlane.xlu0 %87
          %v89 = vmax.f32 %v88, 1e-24
          %v90 = vrsqrt.pop %v89
          %v91 = vmul.f32 %v85, %v90
          %92 = vst [vmem:[#allocation2] sm:$0xff] %v91
          %93 = vxpose.xlu0.b32.start [1/16] %v91, 128
          %94 = vxpose.xlu0.b32.cont [2/16] 0.0, 128
          %95 = vxpose.xlu0.b32.cont [3/16] 0.0, 128
          %96 = vxpose.xlu0.b32.cont [4/16] 0.0, 128
          %97 = vxpose.xlu0.b32.cont [5/16] 0.0, 128
          %98 = vxpose.xlu0.b32.cont [6/16] 0.0, 128
          %99 = vxpose.xlu0.b32.cont [7/16] 0.0, 128
          %100 = vxpose.xlu0.b32.cont [8/16] 0.0, 128
          %101 = vxpose.xlu0.b32.cont [9/16] 0.0, 128
          %102 = vxpose.xlu0.b32.cont [10/16] 0.0, 128
          %103 = vxpose.xlu0.b32.cont [11/16] 0.0, 128
          %104 = vxpose.xlu0.b32.cont [12/16] 0.0, 128
          %105 = vxpose.xlu0.b32.cont [13/16] 0.0, 128
          %106 = vxpose.xlu0.b32.cont [14/16] 0.0, 128
          %107 = vxpose.xlu0.b32.cont [15/16] 0.0, 128
          %108 = vxpose.xlu0.b32.end [16/16] 0.0, 128
          %v109 = vpop.trf.xlu0
          %v110 = vpop.trf.xlu0
          %v111 = vpop.trf.xlu0
          %v112 = vpop.trf.xlu0
          %v113 = vpop.trf.xlu0
          %v114 = vpop.trf.xlu0
          %v115 = vpop.trf.xlu0
          %v116 = vpop.trf.xlu0
          %v117 = vpop.trf.xlu0
          %v118 = vpop.trf.xlu0
          %v119 = vpop.trf.xlu0
          %v120 = vpop.trf.xlu0
          %v121 = vpop.trf.xlu0
          %v122 = vpop.trf.xlu0
          %v123 = vpop.trf.xlu0
          %v124 = vpop.trf.xlu0
          %vm125 = vcmask 64512
          %126 = vst.msk [vmem:[#allocation3] sm:$0xff] %vm125, %v109
          %127 = vst.msk [vmem:[#allocation3 + $0x8] sm:$0xff] %vm125, %v110
          %128 = vst.msk [vmem:[#allocation3 + $0x10] sm:$0xff] %vm125, %v111
          %129 = vst.msk [vmem:[#allocation3 + $0x18] sm:$0xff] %vm125, %v112
          %130 = vst.msk [vmem:[#allocation3 + $0x20] sm:$0xff] %vm125, %v113
          %131 = vst.msk [vmem:[#allocation3 + $0x28] sm:$0xff] %vm125, %v114
          %132 = vst.msk [vmem:[#allocation3 + $0x30] sm:$0xff] %vm125, %v115
          %133 = vst.msk [vmem:[#allocation3 + $0x38] sm:$0xff] %vm125, %v116
          %134 = vst.msk [vmem:[#allocation3 + $0x40] sm:$0xff] %vm125, %v117
          %135 = vst.msk [vmem:[#allocation3 + $0x48] sm:$0xff] %vm125, %v118
          %136 = vst.msk [vmem:[#allocation3 + $0x50] sm:$0xff] %vm125, %v119
          %137 = vst.msk [vmem:[#allocation3 + $0x58] sm:$0xff] %vm125, %v120
          %138 = vst.msk [vmem:[#allocation3 + $0x60] sm:$0xff] %vm125, %v121
          %139 = vst.msk [vmem:[#allocation3 + $0x68] sm:$0xff] %vm125, %v122
          %140 = vst.msk [vmem:[#allocation3 + $0x70] sm:$0xff] %vm125, %v123
          %141 = vst.msk [vmem:[#allocation3 + $0x78] sm:$0xff] %vm125, %v124
          %s142 = scalar_lea.sflag [#allocation7], 1
          // Predicated region
          $region21: #{tpu_custom_call.1} parent=15 // pred_check
            _
          $region22: #{tpu_custom_call.1} parent=15 // pred_check_branch
            %144 = sbr.rel target = $region24
          $region23: #{tpu_custom_call.1} parent=15 // pred_region
            %145 = sst [smem:[#allocation12]] [#allocation15]
            %146 = sst [smem:[#allocation13]] [#allocation14]
          $region24: #{tpu_custom_call.1} parent=15 // pred_fallthru
            _
          %148 = shalt.err (0)
          %s150 = sshll.u32 [#allocation5], 4
          %s151 = int_to_ptr.vmem [resolvable:$true] %s150
          %153 = dma.hbm_to_vmem [thread:$0]  %s1, 128, %s151, %s142
          %s154 = sshll.u32 %s82, 4
          %155 = dma.done %s142, %s154
          %v156 = vld [vmem:[#allocation5] sm:$0xff]
          %v157 = vmul.f32 %v156, %v156
          %158 = vadd.xlane.f32.xlu0 %v157
          %v159 = vpop.xlane.xlu0 %158
          %v160 = vmax.f32 %v159, 1e-24
          %v161 = vrsqrt.pop %v160
          %v162 = vmul.f32 %v156, %v161
          %163 = vst [vmem:[#allocation2 + $0x8] sm:$0xff] %v162
          %164 = vxpose.xlu0.b32.start [1/16] %v162, 128
          %165 = vxpose.xlu0.b32.cont [2/16] 0.0, 128
          %166 = vxpose.xlu0.b32.cont [3/16] 0.0, 128
          %167 = vxpose.xlu0.b32.cont [4/16] 0.0, 128
          %168 = vxpose.xlu0.b32.cont [5/16] 0.0, 128
          %169 = vxpose.xlu0.b32.cont [6/16] 0.0, 128
          %170 = vxpose.xlu0.b32.cont [7/16] 0.0, 128
          %171 = vxpose.xlu0.b32.cont [8/16] 0.0, 128
          %172 = vxpose.xlu0.b32.cont [9/16] 0.0, 128
          %173 = vxpose.xlu0.b32.cont [10/16] 0.0, 128
          %174 = vxpose.xlu0.b32.cont [11/16] 0.0, 128
          %175 = vxpose.xlu0.b32.cont [12/16] 0.0, 128
          %176 = vxpose.xlu0.b32.cont [13/16] 0.0, 128
          %177 = vxpose.xlu0.b32.cont [14/16] 0.0, 128
          %178 = vxpose.xlu0.b32.cont [15/16] 0.0, 128
          %179 = vxpose.xlu0.b32.end [16/16] 0.0, 128
          %v180 = vpop.trf.xlu0
          %v181 = vpop.trf.xlu0
          %v182 = vpop.trf.xlu0
          %v183 = vpop.trf.xlu0
          %v184 = vpop.trf.xlu0
          %v185 = vpop.trf.xlu0
          %v186 = vpop.trf.xlu0
          %v187 = vpop.trf.xlu0
          %v188 = vpop.trf.xlu0
          %v189 = vpop.trf.xlu0
          %v190 = vpop.trf.xlu0
          %v191 = vpop.trf.xlu0
          %v192 = vpop.trf.xlu0
          %v193 = vpop.trf.xlu0
          %v194 = vpop.trf.xlu0
          %v195 = vpop.trf.xlu0
          %212 = vrot.lane.b32.xlu0 %v180, 8
          %v213 = vpop.permute.xlu0 %212
          %214 = vrot.lane.b32.xlu0 %v181, 8
          %v215 = vpop.permute.xlu0 %214
          %216 = vrot.lane.b32.xlu0 %v182, 8
          %v217 = vpop.permute.xlu0 %216
          %218 = vrot.lane.b32.xlu0 %v183, 8
          %v219 = vpop.permute.xlu0 %218
          %220 = vrot.lane.b32.xlu0 %v184, 8
          %v221 = vpop.permute.xlu0 %220
          %222 = vrot.lane.b32.xlu0 %v185, 8
          %v223 = vpop.permute.xlu0 %222
          %224 = vrot.lane.b32.xlu0 %v186, 8
          %v225 = vpop.permute.xlu0 %224
          %226 = vrot.lane.b32.xlu0 %v187, 8
          %v227 = vpop.permute.xlu0 %226
          %228 = vrot.lane.b32.xlu0 %v188, 8
          %v229 = vpop.permute.xlu0 %228
          %230 = vrot.lane.b32.xlu0 %v189, 8
          %v231 = vpop.permute.xlu0 %230
          %232 = vrot.lane.b32.xlu0 %v190, 8
          %v233 = vpop.permute.xlu0 %232
          %234 = vrot.lane.b32.xlu0 %v191, 8
          %v235 = vpop.permute.xlu0 %234
          %236 = vrot.lane.b32.xlu0 %v192, 8
          %v237 = vpop.permute.xlu0 %236
          %238 = vrot.lane.b32.xlu0 %v193, 8
          %v239 = vpop.permute.xlu0 %238
          %240 = vrot.lane.b32.xlu0 %v194, 8
          %v241 = vpop.permute.xlu0 %240
          %242 = vrot.lane.b32.xlu0 %v195, 8
          %v243 = vpop.permute.xlu0 %242
          %vm260 = vcmask 130112
          %261 = vst.msk [vmem:[#allocation3] sm:$0xff] %vm260, %v213
          %262 = vst.msk [vmem:[#allocation3 + $0x8] sm:$0xff] %vm260, %v215
          %263 = vst.msk [vmem:[#allocation3 + $0x10] sm:$0xff] %vm260, %v217
          %264 = vst.msk [vmem:[#allocation3 + $0x18] sm:$0xff] %vm260, %v219
          %265 = vst.msk [vmem:[#allocation3 + $0x20] sm:$0xff] %vm260, %v221
          %266 = vst.msk [vmem:[#allocation3 + $0x28] sm:$0xff] %vm260, %v223
          %267 = vst.msk [vmem:[#allocation3 + $0x30] sm:$0xff] %vm260, %v225
          %268 = vst.msk [vmem:[#allocation3 + $0x38] sm:$0xff] %vm260, %v227
          %269 = vst.msk [vmem:[#allocation3 + $0x40] sm:$0xff] %vm260, %v229
          %270 = vst.msk [vmem:[#allocation3 + $0x48] sm:$0xff] %vm260, %v231
          %271 = vst.msk [vmem:[#allocation3 + $0x50] sm:$0xff] %vm260, %v233
          %272 = vst.msk [vmem:[#allocation3 + $0x58] sm:$0xff] %vm260, %v235
          %273 = vst.msk [vmem:[#allocation3 + $0x60] sm:$0xff] %vm260, %v237
          %274 = vst.msk [vmem:[#allocation3 + $0x68] sm:$0xff] %vm260, %v239
          %275 = vst.msk [vmem:[#allocation3 + $0x70] sm:$0xff] %vm260, %v241
          %276 = vst.msk [vmem:[#allocation3 + $0x78] sm:$0xff] %vm260, %v243
        $region16: #{tpu_custom_call.1} parent=11 // pred_fallthru
          _
        %s277 = sadd.s32 %s17, %s18
        %s278 = smul.u32 %s277, 8
        %s279 = scalar_lea.vmem [#allocation2], %s278
        %v280 = vld [vmem:[%s279] sm:$0xff]
        %v281 = vmul.f32 %v280, 2.0
        %v282 = vld [vmem:[#allocation3] sm:$0xff]
        %v283 = vld [vmem:[#allocation3 + $0x8] sm:$0xff]
        %v284 = vld [vmem:[#allocation3 + $0x10] sm:$0xff]
        %v285 = vld [vmem:[#allocation3 + $0x18] sm:$0xff]
        %v286 = vld [vmem:[#allocation3 + $0x20] sm:$0xff]
        %v287 = vld [vmem:[#allocation3 + $0x28] sm:$0xff]
        %v288 = vld [vmem:[#allocation3 + $0x30] sm:$0xff]
        %v289 = vld [vmem:[#allocation3 + $0x38] sm:$0xff]
        %v290 = vld [vmem:[#allocation3 + $0x40] sm:$0xff]
        %v291 = vld [vmem:[#allocation3 + $0x48] sm:$0xff]
        %v292 = vld [vmem:[#allocation3 + $0x50] sm:$0xff]
        %v293 = vld [vmem:[#allocation3 + $0x58] sm:$0xff]
        %v294 = vld [vmem:[#allocation3 + $0x60] sm:$0xff]
        %v295 = vld [vmem:[#allocation3 + $0x68] sm:$0xff]
        %v296 = vld [vmem:[#allocation3 + $0x70] sm:$0xff]
        %v297 = vld [vmem:[#allocation3 + $0x78] sm:$0xff]
        %298 = vmatprep.subr.mxu0 0.0
        %299 = vmatpush1.msra.mxu0 %v282
        %300 = vmatprep.subr.mxu0 0.0
        %301 = vmatpush1.msra.mxu0 %v283
        %302 = vmatprep.subr.mxu0 0.0
        %303 = vmatpush1.msra.mxu0 %v284
        %304 = vmatprep.subr.mxu0 0.0
        %305 = vmatpush1.msra.mxu0 %v285
        %306 = vmatprep.subr.mxu0 0.0
        %307 = vmatpush1.msra.mxu0 %v286
        %308 = vmatprep.subr.mxu0 0.0
        %309 = vmatpush1.msra.mxu0 %v287
        %310 = vmatprep.subr.mxu0 0.0
        %311 = vmatpush1.msra.mxu0 %v288
        %312 = vmatprep.subr.mxu0 0.0
        %313 = vmatpush1.msra.mxu0 %v289
        %314 = vmatprep.subr.mxu0 0.0
        %315 = vmatpush1.msra.mxu0 %v290
        %316 = vmatprep.subr.mxu0 0.0
        %317 = vmatpush1.msra.mxu0 %v291
        %318 = vmatprep.subr.mxu0 0.0
        %319 = vmatpush1.msra.mxu0 %v292
        %320 = vmatprep.subr.mxu0 0.0
        %321 = vmatpush1.msra.mxu0 %v293
        %322 = vmatprep.subr.mxu0 0.0
        %323 = vmatpush1.msra.mxu0 %v294
        %324 = vmatprep.subr.mxu0 0.0
        %325 = vmatpush1.msra.mxu0 %v295
        %326 = vmatprep.subr.mxu0 0.0
        %327 = vmatpush1.msra.mxu0 %v296
        %328 = vmatprep.subr.mxu0 0.0
        %329 = vmatpush1.msra.mxu0 %v297
        %330 = vmatprep.subr.mxu0 0.0
        %331 = vmatpush1.msra.mxu0 0.0
        %332 = vmatprep.subr.mxu0 0.0
        %333 = vmatpush1.msra.mxu0 0.0
        %334 = vmatprep.subr.mxu0 0.0
        %335 = vmatpush1.msra.mxu0 0.0
        %336 = vmatprep.subr.mxu0 0.0
        %337 = vmatpush1.msra.mxu0 0.0
        %338 = vmatprep.subr.mxu0 0.0
        %339 = vmatpush1.msra.mxu0 0.0
        %340 = vmatprep.subr.mxu0 0.0
        %341 = vmatpush1.msra.mxu0 0.0
        %342 = vmatprep.subr.mxu0 0.0
        %343 = vmatpush1.msra.mxu0 0.0
        %344 = vmatprep.subr.mxu0 0.0
        %345 = vmatpush1.msra.mxu0 0.0
        %346 = vmatprep.subr.mxu0 0.0
        %347 = vmatpush1.msra.mxu0 0.0
        %348 = vmatprep.subr.mxu0 0.0
        %349 = vmatpush1.msra.mxu0 0.0
        %350 = vmatprep.subr.mxu0 0.0
        %351 = vmatpush1.msra.mxu0 0.0
        %352 = vmatprep.subr.mxu0 0.0
        %353 = vmatpush1.msra.mxu0 0.0
        %354 = vmatprep.subr.mxu0 0.0
        %355 = vmatpush1.msra.mxu0 0.0
        %356 = vmatprep.subr.mxu0 0.0
        %357 = vmatpush1.msra.mxu0 0.0
        %358 = vmatprep.subr.mxu0 0.0
        %359 = vmatpush1.msra.mxu0 0.0
        %360 = vmatprep.subr.mxu0 0.0
        %361 = vmatpush1.msra.mxu0 0.0
        %362 = vmatprep.mubr.f32.mxu0 0.0
        %363 = vmatmul.mubr.f32.gmra.mrb[0].mxu0 %v281
        %v364 = vpop.f32.mrb[0].mxu0
        %v365 = vadd.f32 0.0, %v364
        %v366 = vpop.f32.mrb[0].mxu0
        %367 = vdwg.mxu0
        %s368 = sadd.s32 %s278, 8
        %p369 = scmp.lt.s32.totalorder %s368, 0
        %s370 = ssub.s32 0, %s368
        %s371 = scalar_select %p369, %s370, %s368
        %s372 = sand.u32 %s371, 15
        %s373 = ssub.s32 0, %s372
        %s374 = scalar_select %p369, %s373, %s372
        %p375 = scmp.ne.s32.totalorder %s374, 0
        %p376 = scmp.lt.s32.totalorder %s374, 0
        %p377 = pnand %p376, %p375
        %p378 = pneg %p377
        %s379 = sadd.s32 %s374, 16
        %s380 = scalar_select %p378, %s379, %s374
        %s381 = scalar_lea.vmem [#allocation2], %s380
        %v382 = vld [vmem:[%s381] sm:$0xff]
        %v383 = vmul.f32 %v281, %v382
        %384 = vadd.xlane.f32.xlu0 %v383
        %v385 = vpop.xlane.xlu0 %384
        %v386 = vld [vmem:[#allocation4] sm:$0xff]
        %v387 = vstv %s278
        %vm388 = vcmp.eq.s32.totalorder %v386, %v387
        %v389 = vsub.f32 %v365, 2.0
        %v390 = vmul.f32 %v389, 1.442695
        %v391 = vpow.pop %v390
        %v392 = vsel %vm388, 0.0, %v391
        %vm393 = vcmask 130048
        %v394 = vsel %vm393, %v392, 0.0
        %395 = vadd.xlane.f32.xlu0 %v394
        %v396 = vpop.xlane.xlu0 %395
        %v397 = vlog2.pop %v396
        %v398 = vmul.f32 %v397, 0.6931472
        %v399 = vadd.f32 %v398, 2.0
        %v400 = vld [vmem:[#allocation6] sm:$0x1]
        %v401 = vsub.f32 %v399, %v385
        %v402 = vrot.slane %v401, 4
        %v403 = vadd.f32 %v401, %v402
        %v404 = vrot.slane %v403, 2
        %v405 = vadd.f32 %v403, %v404
        %v406 = vrot.slane %v405, 1
        %v407 = vadd.f32 %v405, %v406
        %v408 = vadd.f32 %v400, %v407
        %vm409 = vcmask 0
        %410 = vst.msk [vmem:[#allocation6] sm:$0x1] %vm409, %v408
        // Predicated region
        $region25: #{tpu_custom_call.1} parent=11 // pred_check
          %p411 = pneg %p58
        $region26: #{tpu_custom_call.1} parent=11 // pred_check_branch
          %413 = sbr.rel (%p411) target = $region28
        $region27: #{tpu_custom_call.1} parent=11 // pred_region
          %v414 = vld [vmem:[#allocation6] sm:$0x1]
          %s415 = vtos %v414
          %s416 = smul.f32 %s415, 0.0625
          %v417 = vstv %s416
          %418 = vst [vmem:[%s57] sm:$0xff] %v417
        $region28: #{tpu_custom_call.1} parent=11 // pred_fallthru
          _
        %s419 = sand.u32 %s30, 1
        %s420 = scalar_lea.sflag [#allocation9], %s419
        %s421 = sand.u32 %s30, 1
        %s422 = smul.addr %s421, 8
        %s423 = scalar_lea.vmem [#allocation8], %s422
        // Predicated region
        $region29: #{tpu_custom_call.1} parent=11 // pred_check
          %p424 = pneg %p36
        $region30: #{tpu_custom_call.1} parent=11 // pred_check_branch
          %426 = sbr.rel (%p424) target = $region32
        $region31: #{tpu_custom_call.1} parent=11 // pred_region
          %s428 = ssub.s32 128, 128
          %429 = vsyncadd %s420, %s428
          %s430 = smul.addr %s17, 128
          %s431 = scalar_lea.hbm %s2, %s430
          %s433 = sshll.u32 %s423, 4
          %s434 = int_to_ptr.vmem [resolvable:$true] %s433
          %436 = dma.vmem_to_hbm [thread:$0]  %s434, 128, %s431, %s420
        $region32: #{tpu_custom_call.1} parent=11 // pred_fallthru
          _
      $region12: #{tpu_custom_call.1} parent=5 // pred_fallthru
        _
      %p437 = scmp.le.s32.totalorder 1, %s11
      // Predicated region
      $region33: #{tpu_custom_call.1} parent=5 // pred_check
        %p438 = pneg %p437
      $region34: #{tpu_custom_call.1} parent=5 // pred_check_branch
        %440 = sbr.rel (%p438) target = $region36
      $region35: #{tpu_custom_call.1} parent=5 // pred_region
        %s441 = ssub.s32 %s11, 1
        // Predicated region
        $region37: #{tpu_custom_call.1} parent=35 // pred_check
          %p442 = pneg %p42
        $region38: #{tpu_custom_call.1} parent=35 // pred_check_branch
          %444 = sbr.rel (%p442) target = $region40
        $region39: #{tpu_custom_call.1} parent=35 // pred_region
          %s445 = sand.u32 %s33, 1
          %s446 = scalar_lea.sflag [#allocation9], %s445
          %s447 = sand.u32 %s33, 1
          %s448 = smul.addr %s447, 8
          %s449 = scalar_lea.vmem [#allocation8], %s448
          %450 = dma.done %s446, 128
        $region40: #{tpu_custom_call.1} parent=35 // pred_fallthru
          _
      $region36: #{tpu_custom_call.1} parent=5 // pred_fallthru
        _
    $region6: #{tpu_custom_call.1} parent=1 // loop_footer
      %s15 = sadd.s32 1, %s11
    $region7: #{tpu_custom_call.1} parent=1 // loop_footer_branch
      %10 = sbr.rel target = $region3
    $region8: #{tpu_custom_call.1} parent=1 // loop_exit
      _
    %451 = vsyncpa [#allocation9], 1
    %s452 = scalar_lea.sflag [#allocation9], 1
    %453 = vsyncpa %s452, 1
  %454 = vsyncmov [#allocation7]
  %s455 = vpop.sfrf %454
  %p456 = scmp.eq.s32.totalorder %s455, 0
  %p457 = pneg %p456
  %459 = shalt.err (%p457)
  %s460 = scalar_lea.sflag [#allocation7], 1
  %461 = vsyncmov %s460
  %s462 = vpop.sfrf %461
  %p463 = scmp.eq.s32.totalorder %s462, 0
  %p464 = pneg %p463
  %466 = shalt.err (%p464)

</llo_original>
